<compile_context>
chip_gen: v7x
topology: tpu7x:2x2x1
jax: 0.10.0
libtpu: 0.0.40
codegen_flags: <defaults>
</compile_context>

<pallas_src>
import functools

import jax
import jax.numpy as jnp
from jax import lax
from jax.experimental import pallas as pl
from jax.experimental.pallas import tpu as pltpu


def _conv_bn_relu_kernel(x_ref, w_ref, b_ref, o_ref, *,
                         ksize, pad, h, w, cin, residual):
    """Fused ReflectionPad2d + Conv2d + folded-BN + ReLU (+ identity residual).

    x_ref : (1, cin, H*W)    flattened NCHW image (lanes = H*W, lane-dense)
    w_ref : (cout, K*K*cin)  BN-folded conv weights, row t = (dy*K + dx)*cin + ci
    b_ref : (cout, 1)        BN-folded bias
    o_ref : (1, cout, H*W)   output, lane-dense
    """
    hw = h * w
    x_flat = x_ref[0].astype(jnp.float32)                      # (cin, H*W)

    # ---- fused ReflectionPad2d, row direction (pitch stays W) ------------
    # xr row r corresponds to original row reflect(r - pad).
    if pad > 0:
        top = [x_flat[:, (pad - t) * w:(pad - t + 1) * w] for t in range(pad)]
        bot = [x_flat[:, (h - 2 - t) * w:(h - 1 - t) * w] for t in range(pad)]
        xr = jnp.concatenate(top + [x_flat] + bot, axis=-1)     # (cin, (H+2p)*W)
        # `pad` guard lanes at both ends so every tap below is an in-bounds
        # static lane slice; guard values only reach masked-out positions.
        n = xr.shape[-1]
        xr = jnp.concatenate([xr[:, :pad], xr, xr[:, n - pad:]], axis=-1)
        # Column index (0..W-1) of every output lane, built without mod/div.
        jj = lax.broadcasted_iota(jnp.int32, (1, w), 1)
        jrow = jnp.concatenate([jj] * h, axis=-1)               # (1, H*W)
    else:
        xr = x_flat
        jrow = None

    # ---- in-kernel im2col: K*K taps = shifted lane windows + column fix --
    taps = []
    for dy in range(ksize):
        base = [xr[:, dy * w + dx: dy * w + dx + hw] for dx in range(ksize)]
        for dx in range(ksize):
            tap = base[dx]
            # Column reflection at the left/right image edge (pad <= 1):
            # the reflected value equals what the mirror tap reads there.
            if dx < pad:
                tap = jnp.where(jrow < (pad - dx), base[2 * pad - dx], tap)
            elif dx > pad:
                tap = jnp.where(jrow >= w - (dx - pad), base[2 * pad - dx], tap)
            taps.append(tap)
    patches = taps[0] if len(taps) == 1 else jnp.concatenate(taps, axis=0)
    # patches: (K*K*cin, H*W), row index = (dy*K + dx)*cin + ci.

    # ---- one MXU matmul + folded-BN bias + ReLU (+ residual), one store --
    y = jnp.dot(w_ref[...], patches,
                preferred_element_type=jnp.float32,
                precision=jax.lax.Precision.HIGHEST)            # (cout, H*W)
    y = jnp.maximum(y + b_ref[...], 0.0)
    if residual:
        y = y + x_flat            # identity projection (cin == cout, stride 1)
    o_ref[0] = y.astype(o_ref.dtype)


def basic_conv_block(x, conv_weight, bn_gamma, bn_beta, bn_mean, bn_var,
                     *, eps=1e-5, residual_connection=False):
    """
    x           : (N, Cin, H, W) float32   (PyTorch NCHW convention)
    conv_weight : (Cout, Cin, K, K)        Conv2d weight (bias=False, BN used)
    bn_*        : (Cout,)                  BatchNorm2d inference parameters
    returns     : (N, Cout, H, W)
    """
    N, cin, H, W = x.shape
    cout, cin_w, K, K2 = conv_weight.shape
    assert cin_w == cin and K == K2
    if residual_connection and cin != cout:
        raise NotImplementedError(
            "residual projection conv (in_channels != out_channels) not implemented")
    if K % 2 == 0:
        raise NotImplementedError("even kernel sizes not implemented")
    pad = (K - 1) // 2          # calculate_padding(kernel_size) -> 'same'
    if pad > 1:
        raise NotImplementedError("kernel_size > 3 (pad > 1) not implemented")

    # Fold inference BatchNorm into the bias-free conv.
    scale = bn_gamma / jnp.sqrt(bn_var + eps)
    w_folded = (conv_weight * scale[:, None, None, None]).astype(jnp.float32)
    b_folded = (bn_beta - bn_mean * scale).astype(jnp.float32).reshape(cout, 1)
    # Weight layout matching the in-kernel patch rows: t = (dy*K + dx)*cin + ci.
    T = K * K * cin
    w2d = jnp.transpose(w_folded, (0, 2, 3, 1)).reshape(cout, T)

    x_flat = x.reshape(N, cin, H * W)       # free (contiguous) reshape, no pad

    kernel = functools.partial(
        _conv_bn_relu_kernel, ksize=K, pad=pad, h=H, w=W, cin=cin,
        residual=residual_connection)

    out = pl.pallas_call(
        kernel,
        out_shape=jax.ShapeDtypeStruct((N, cout, H * W), x.dtype),
        grid=(N,),
        in_specs=[
            pl.BlockSpec((1, cin, H * W), lambda n: (n, 0, 0)),
            pl.BlockSpec((cout, T), lambda n: (0, 0)),
            pl.BlockSpec((cout, 1), lambda n: (0, 0)),
        ],
        out_specs=pl.BlockSpec((1, cout, H * W), lambda n: (n, 0, 0)),
        compiler_params=pltpu.CompilerParams(
            dimension_semantics=("parallel",)),
    )(x_flat, w2d, b_folded)
    return out.reshape(N, cout, H, W)


def _reference(x, w, gamma, beta, mean, var, eps=1e-5, residual=False):
    # Pure-JAX reference of the PyTorch forward.
    K = w.shape[-1]
    pad = (K - 1) // 2
    xp = jnp.pad(x, ((0, 0), (0, 0), (pad, pad), (pad, pad)), mode="reflect")
    y = lax.conv_general_dilated(
        xp, w, window_strides=(1, 1), padding="VALID",
        dimension_numbers=("NCHW", "OIHW", "NCHW"),
        precision=lax.Precision.HIGHEST)
    scale = gamma / jnp.sqrt(var + eps)
    shift = beta - mean * scale
    y = y * scale[None, :, None, None] + shift[None, :, None, None]
    y = jnp.maximum(y, 0.0)
    if residual:
        y = y + x
    return y


if __name__ == "__main__":
    key = jax.random.PRNGKey(0)
    ks = jax.random.split(key, 8)

    # module config: in_channels=4, out_channels=8, kernel_size=3,
    # ReflectionPad + BatchNorm2d + ReLU, no downsample, no residual (defaults)
    N, Cin, H, W = 2, 4, 16, 16
    Cout, K = 8, 3

    x = jax.random.normal(ks[0], (N, Cin, H, W), dtype=jnp.float32)
    w = jax.random.normal(ks[1], (Cout, Cin, K, K), dtype=jnp.float32) * 0.2
    gamma = 1.0 + 0.1 * jax.random.normal(ks[2], (Cout,), dtype=jnp.float32)
    beta = 0.1 * jax.random.normal(ks[3], (Cout,), dtype=jnp.float32)
    mean = 0.1 * jax.random.normal(ks[4], (Cout,), dtype=jnp.float32)
    var = jnp.abs(jax.random.normal(ks[5], (Cout,), dtype=jnp.float32)) + 0.5

    out = jax.block_until_ready(basic_conv_block(x, w, gamma, beta, mean, var))
    ref = _reference(x, w, gamma, beta, mean, var)
    assert out.shape == (N, Cout, H, W)
    assert jnp.allclose(out, ref, atol=1e-3, rtol=1e-3), "mismatch vs reference"

    # residual_connection=True with identity projection (Cin == Cout, stride 1)
    Cin2 = Cout2 = 8
    x2 = jax.random.normal(ks[6], (N, Cin2, H, W), dtype=jnp.float32)
    w2 = jax.random.normal(ks[7], (Cout2, Cin2, K, K), dtype=jnp.float32) * 0.2
    out2 = jax.block_until_ready(
        basic_conv_block(x2, w2, gamma, beta, mean, var,
                         residual_connection=True))
    ref2 = _reference(x2, w2, gamma, beta, mean, var, residual=True)
    assert jnp.allclose(out2, ref2, atol=1e-3, rtol=1e-3), "residual mismatch"

    print("KERNEL_OK")
</pallas_src>

<mosaic_0001>
module attributes {stable_mosaic.version = 11 : i64} {
  func.func @_conv_bn_relu_kernel(%arg0: i32, %arg1: memref<1x4x256xf32, #tpu.memory_space<vmem>>, %arg2: memref<8x36xf32, #tpu.memory_space<vmem>>, %arg3: memref<8x1xf32, #tpu.memory_space<vmem>>, %arg4: memref<1x8x256xf32, #tpu.memory_space<vmem>>) attributes {dimension_semantics = [#tpu.dimension_semantics<parallel>], iteration_bounds = array<i64: 2>, scalar_prefetch = 0 : i64, scratch_operands = 0 : i64, tpu.core_type = #tpu.core_type<tc>, window_params = [{transform_indices = @transform_0, window_bounds = array<i64: 1, 4, 256>}, {pipeline_mode = #tpu.pipeline_mode<synchronous>, transform_indices = @transform_1, window_bounds = array<i64: 8, 36>}, {pipeline_mode = #tpu.pipeline_mode<synchronous>, transform_indices = @transform_2, window_bounds = array<i64: 8, 1>}, {transform_indices = @transform_3, window_bounds = array<i64: 1, 8, 256>}]} {
    %c0 = arith.constant 0 : index
    %c0_0 = arith.constant 0 : index
    %c0_1 = arith.constant 0 : index
    %0 = vector.load %arg1[%c0, %c0_0, %c0_1] : memref<1x4x256xf32, #tpu.memory_space<vmem>>, vector<1x4x256xf32>
    %1 = vector.shape_cast %0 : vector<1x4x256xf32> to vector<4x256xf32>
    %2 = vector.extract_strided_slice %1 {offsets = [0, 16], sizes = [4, 16], strides = [1, 1]} : vector<4x256xf32> to vector<4x16xf32>
    %3 = vector.extract_strided_slice %1 {offsets = [0, 224], sizes = [4, 16], strides = [1, 1]} : vector<4x256xf32> to vector<4x16xf32>
    %4 = tpu.concatenate %2, %1, %3 in 1 : vector<4x16xf32>, vector<4x256xf32>, vector<4x16xf32> -> vector<4x288xf32>
    %5 = vector.extract_strided_slice %4 {offsets = [0, 0], sizes = [4, 1], strides = [1, 1]} : vector<4x288xf32> to vector<4x1xf32>
    %6 = vector.extract_strided_slice %4 {offsets = [0, 287], sizes = [4, 1], strides = [1, 1]} : vector<4x288xf32> to vector<4x1xf32>
    %7 = tpu.concatenate %5, %4, %6 in 1 : vector<4x1xf32>, vector<4x288xf32>, vector<4x1xf32> -> vector<4x290xf32>
    %8 = tpu.iota {dimensions = array<i32: 1>} : vector<1x16xi32>
    %9 = tpu.concatenate %8, %8, %8, %8, %8, %8, %8, %8, %8, %8, %8, %8, %8, %8, %8, %8 in 1 : vector<1x16xi32>, vector<1x16xi32>, vector<1x16xi32>, vector<1x16xi32>, vector<1x16xi32>, vector<1x16xi32>, vector<1x16xi32>, vector<1x16xi32>, vector<1x16xi32>, vector<1x16xi32>, vector<1x16xi32>, vector<1x16xi32>, vector<1x16xi32>, vector<1x16xi32>, vector<1x16xi32>, vector<1x16xi32> -> vector<1x256xi32>
    %10 = vector.extract_strided_slice %7 {offsets = [0, 0], sizes = [4, 256], strides = [1, 1]} : vector<4x290xf32> to vector<4x256xf32>
    %11 = vector.extract_strided_slice %7 {offsets = [0, 1], sizes = [4, 256], strides = [1, 1]} : vector<4x290xf32> to vector<4x256xf32>
    %12 = vector.extract_strided_slice %7 {offsets = [0, 2], sizes = [4, 256], strides = [1, 1]} : vector<4x290xf32> to vector<4x256xf32>
    %c1_i32 = arith.constant 1 : i32
    %13 = vector.broadcast %c1_i32 : i32 to vector<1x256xi32>
    %14 = arith.cmpi slt, %9, %13 : vector<1x256xi32>
    %15 = vector.shape_cast %14 : vector<1x256xi1> to vector<1x256xi1>
    %16 = vector.broadcast %15 : vector<1x256xi1> to vector<4x256xi1>
    %17 = arith.select %16, %12, %10 : vector<4x256xi1>, vector<4x256xf32>
    %c15_i32 = arith.constant 15 : i32
    %18 = vector.broadcast %c15_i32 : i32 to vector<1x256xi32>
    %19 = arith.cmpi sge, %9, %18 : vector<1x256xi32>
    %20 = vector.shape_cast %19 : vector<1x256xi1> to vector<1x256xi1>
    %21 = vector.broadcast %20 : vector<1x256xi1> to vector<4x256xi1>
    %22 = arith.select %21, %10, %12 : vector<4x256xi1>, vector<4x256xf32>
    %23 = vector.extract_strided_slice %7 {offsets = [0, 16], sizes = [4, 256], strides = [1, 1]} : vector<4x290xf32> to vector<4x256xf32>
    %24 = vector.extract_strided_slice %7 {offsets = [0, 17], sizes = [4, 256], strides = [1, 1]} : vector<4x290xf32> to vector<4x256xf32>
    %25 = vector.extract_strided_slice %7 {offsets = [0, 18], sizes = [4, 256], strides = [1, 1]} : vector<4x290xf32> to vector<4x256xf32>
    %c1_i32_2 = arith.constant 1 : i32
    %26 = vector.broadcast %c1_i32_2 : i32 to vector<1x256xi32>
    %27 = arith.cmpi slt, %9, %26 : vector<1x256xi32>
    %28 = vector.shape_cast %27 : vector<1x256xi1> to vector<1x256xi1>
    %29 = vector.broadcast %28 : vector<1x256xi1> to vector<4x256xi1>
    %30 = arith.select %29, %25, %23 : vector<4x256xi1>, vector<4x256xf32>
    %c15_i32_3 = arith.constant 15 : i32
    %31 = vector.broadcast %c15_i32_3 : i32 to vector<1x256xi32>
    %32 = arith.cmpi sge, %9, %31 : vector<1x256xi32>
    %33 = vector.shape_cast %32 : vector<1x256xi1> to vector<1x256xi1>
    %34 = vector.broadcast %33 : vector<1x256xi1> to vector<4x256xi1>
    %35 = arith.select %34, %23, %25 : vector<4x256xi1>, vector<4x256xf32>
    %36 = vector.extract_strided_slice %7 {offsets = [0, 32], sizes = [4, 256], strides = [1, 1]} : vector<4x290xf32> to vector<4x256xf32>
    %37 = vector.extract_strided_slice %7 {offsets = [0, 33], sizes = [4, 256], strides = [1, 1]} : vector<4x290xf32> to vector<4x256xf32>
    %38 = vector.extract_strided_slice %7 {offsets = [0, 34], sizes = [4, 256], strides = [1, 1]} : vector<4x290xf32> to vector<4x256xf32>
    %c1_i32_4 = arith.constant 1 : i32
    %39 = vector.broadcast %c1_i32_4 : i32 to vector<1x256xi32>
    %40 = arith.cmpi slt, %9, %39 : vector<1x256xi32>
    %41 = vector.shape_cast %40 : vector<1x256xi1> to vector<1x256xi1>
    %42 = vector.broadcast %41 : vector<1x256xi1> to vector<4x256xi1>
    %43 = arith.select %42, %38, %36 : vector<4x256xi1>, vector<4x256xf32>
    %c15_i32_5 = arith.constant 15 : i32
    %44 = vector.broadcast %c15_i32_5 : i32 to vector<1x256xi32>
    %45 = arith.cmpi sge, %9, %44 : vector<1x256xi32>
    %46 = vector.shape_cast %45 : vector<1x256xi1> to vector<1x256xi1>
    %47 = vector.broadcast %46 : vector<1x256xi1> to vector<4x256xi1>
    %48 = arith.select %47, %36, %38 : vector<4x256xi1>, vector<4x256xf32>
    %49 = tpu.concatenate %17, %11, %22, %30, %24, %35, %43, %37, %48 in 0 : vector<4x256xf32>, vector<4x256xf32>, vector<4x256xf32>, vector<4x256xf32>, vector<4x256xf32>, vector<4x256xf32>, vector<4x256xf32>, vector<4x256xf32>, vector<4x256xf32> -> vector<36x256xf32>
    %c0_6 = arith.constant 0 : index
    %c0_7 = arith.constant 0 : index
    %50 = vector.load %arg2[%c0_6, %c0_7] : memref<8x36xf32, #tpu.memory_space<vmem>>, vector<8x36xf32>
    %cst = arith.constant dense<0.000000e+00> : vector<8x256xf32>
    %51 = tpu.matmul %50, %49, %cst {dimension_numbers = #tpu.dot_dimension_numbers<[1], [0], [0], [1], [0, 0, 1, 1], [], []>, precision = #tpu.contract_precision<fp32>} : vector<8x36xf32>, vector<36x256xf32>, vector<8x256xf32> -> vector<8x256xf32>
    %c0_8 = arith.constant 0 : index
    %c0_9 = arith.constant 0 : index
    %52 = vector.load %arg3[%c0_8, %c0_9] : memref<8x1xf32, #tpu.memory_space<vmem>>, vector<8x1xf32>
    %53 = vector.broadcast %52 : vector<8x1xf32> to vector<8x256xf32>
    %54 = arith.addf %51, %53 : vector<8x256xf32>
    %cst_10 = arith.constant 0.000000e+00 : f32
    %55 = vector.broadcast %cst_10 : f32 to vector<8x256xf32>
    %56 = arith.maximumf %54, %55 : vector<8x256xf32>
    %c0_11 = arith.constant 0 : index
    %c0_12 = arith.constant 0 : index
    %c0_13 = arith.constant 0 : index
    %57 = vector.load %arg4[%c0_11, %c0_12, %c0_13] : memref<1x8x256xf32, #tpu.memory_space<vmem>>, vector<1x8x256xf32>
    %58 = vector.shape_cast %57 : vector<1x8x256xf32> to vector<8x256xf32>
    %59 = vector.shape_cast %56 : vector<8x256xf32> to vector<1x8x256xf32>
    tpu.vector_store %arg4[%c0_11, %c0_12, %c0_13], %59 {strides = array<i32>} : memref<1x8x256xf32, #tpu.memory_space<vmem>>, vector<1x8x256xf32>,
    return
  }
  func.func @transform_0(%arg0: i32) -> (i32, i32, i32) {
    %c0_i32 = arith.constant 0 : i32
    %c0_i32_0 = arith.constant 0 : i32
    %c0_i32_1 = arith.constant 0 : i32
    return %arg0, %c0_i32, %c0_i32_0 : i32, i32, i32
  }
  func.func @transform_1(%arg0: i32) -> (i32, i32) {
    %c0_i32 = arith.constant 0 : i32
    %c0_i32_0 = arith.constant 0 : i32
    %c0_i32_1 = arith.constant 0 : i32
    return %c0_i32, %c0_i32_0 : i32, i32
  }
  func.func @transform_2(%arg0: i32) -> (i32, i32) {
    %c0_i32 = arith.constant 0 : i32
    %c0_i32_0 = arith.constant 0 : i32
    %c0_i32_1 = arith.constant 0 : i32
    return %c0_i32, %c0_i32_0 : i32, i32
  }
  func.func @transform_3(%arg0: i32) -> (i32, i32, i32) {
    %c0_i32 = arith.constant 0 : i32
    %c0_i32_0 = arith.constant 0 : i32
    %c0_i32_1 = arith.constant 0 : i32
    return %arg0, %c0_i32, %c0_i32_0 : i32, i32, i32
  }
}

</mosaic_0001>

<llo_original>
// kernel: tpu_custom_call.1
$region0: #{tpu_custom_call.1}
  #allocation0 [shape = 'u32[]', space=smem, size = 0x4, offset = 0x4, fixed_abs, tag = 'smem constant byte address 0x4 - core index']
  #allocation1 [shape = 'u32[144,128]{1,0:T(1,128)}', space=vmem, size = 0x12000, scoped, tag = 'internal scratch']
  %s0 = inlined_call_operand.hbm [shape: f32[2,4,256], index: 0, kind: input, shape index: {}]
  %s1 = inlined_call_operand.vmem [shape: f32[8,36], index: 1, kind: input, shape index: {}]
  %s2 = inlined_call_operand.vmem [shape: f32[8,1], index: 2, kind: input, shape index: {}]
  %s3 = inlined_call_operand.hbm [shape: f32[2,8,256], index: 3, kind: output, shape index: {}]
  %s4 = sld [smem:[#allocation0]]
  $region49: #{tpu_custom_call.1} parent=0
    _
  %s6 = ssub.s32 1, %s4
  %s7 = scalar_select 0, %s6, %s4
  $region1: #{tpu_custom_call.1} parent=0
    #allocation2 [shape = 'u8[8192]{0}', space=vmem, size = 0x2000, scoped, tag = 'input window, operand 0']
    #allocation3 [shape = 's32[2]{0}', space=sflag, size = 0x8, scoped, tag = 'scoped memory for tpu_custom_call.1']
    #allocation4 [shape = 's32[2]{0}', space=sflag, size = 0x8, scoped, tag = 'scoped memory for tpu_custom_call.1']
    #allocation5 [shape = 'u8[16384]{0}', space=vmem, size = 0x4000, scoped, tag = 'output window, operand 0']
    %8 = vsyncpa [#allocation3], 0
    %s9 = scalar_lea.sflag [#allocation3], 1
    %10 = vsyncpa %s9, 0
    %11 = vsyncpa [#allocation4], 0
    %s12 = scalar_lea.sflag [#allocation4], 1
    %13 = vsyncpa %s12, 0
    loop: start=0, step=1, limit=4
    $region2: #{tpu_custom_call.1} parent=1 // loop_pre_header
      _
    $region3: #{tpu_custom_call.1} parent=1 // loop_header
      %s15 = sphi 0, %s19
      %p16 = scmp.ge.s32.totalorder %s15, 4
      %s25 = sphi 0, %s27
      %s28 = sphi 0, %s25
      %s29 = sphi 0, %s28
      %s45 = sphi 0, %s29
      %s49 = sphi 0, %s49
      %s51 = sphi 0, %s49
      %s52 = sphi 0, %s51
      %s66 = sphi 0, %s52
      %s70 = sphi 0, %s70
      %s72 = sphi 0, %s70
      %s73 = sphi 0, %s72
      %s87 = sphi 0, %s73
      %s93 = sphi 0, %s95
      %s96 = sphi 0, %s93
      %s97 = sphi 0, %s96
      %s113 = sphi 0, %s97
    $region4: #{tpu_custom_call.1} parent=1 // loop_header_branch
      %18 = sbr.rel (%p16) target = $region8
    $region5: #{tpu_custom_call.1} parent=1 // loop_body
      %s20 = ssub.s32 %s15, 1
      %s21 = ssub.s32 %s15, 2
      %s22 = sadd.s32 %s15, 1
      %s23 = ssub.s32 %s15, %s22
      %p24 = scmp.eq.s32.totalorder %s23, 0
      %s26 = sadd.s32 %s25, 1
      %s27 = scalar_select %p24, %s25, %s26
      %p30 = pneg %p24
      %p31 = scmp.eq.s32.totalorder %s15, 1
      %p32 = por %p30, %p31
      %p33 = scmp.ne.s32.totalorder %s25, %s28
      %p34 = scmp.eq.s32.totalorder %s15, 0
      %p35 = por %p33, %p34
      %p36 = scmp.ne.s32.totalorder %s25, %s28
      %p37 = scmp.eq.s32.totalorder %s20, 1
      %p38 = por %p36, %p37
      %p39 = scmp.ne.s32.totalorder %s28, %s29
      %p40 = scmp.eq.s32.totalorder %s20, 0
      %p41 = por %p39, %p40
      %p42 = scmp.ne.s32.totalorder %s28, %s29
      %p43 = scmp.eq.s32.totalorder %s21, 1
      %p44 = por %p42, %p43
      %p46 = scmp.ne.s32.totalorder %s29, %s45
      %p47 = scmp.eq.s32.totalorder %s21, 0
      %p48 = por %p46, %p47
      %s50 = sadd.s32 %s49, 1
      %p53 = scmp.eq.s32.totalorder %s15, 1
      %p54 = scmp.ne.s32.totalorder %s49, %s51
      %p55 = scmp.eq.s32.totalorder %s15, 0
      %p56 = por %p54, %p55
      %p57 = scmp.ne.s32.totalorder %s49, %s51
      %p58 = scmp.eq.s32.totalorder %s20, 1
      %p59 = por %p57, %p58
      %p60 = scmp.ne.s32.totalorder %s51, %s52
      %p61 = scmp.eq.s32.totalorder %s20, 0
      %p62 = por %p60, %p61
      %p63 = scmp.ne.s32.totalorder %s51, %s52
      %p64 = scmp.eq.s32.totalorder %s21, 1
      %p65 = por %p63, %p64
      %p67 = scmp.ne.s32.totalorder %s52, %s66
      %p68 = scmp.eq.s32.totalorder %s21, 0
      %p69 = por %p67, %p68
      %s71 = sadd.s32 %s70, 1
      %p74 = scmp.eq.s32.totalorder %s15, 1
      %p75 = scmp.ne.s32.totalorder %s70, %s72
      %p76 = scmp.eq.s32.totalorder %s15, 0
      %p77 = por %p75, %p76
      %p78 = scmp.ne.s32.totalorder %s70, %s72
      %p79 = scmp.eq.s32.totalorder %s20, 1
      %p80 = por %p78, %p79
      %p81 = scmp.ne.s32.totalorder %s72, %s73
      %p82 = scmp.eq.s32.totalorder %s20, 0
      %p83 = por %p81, %p82
      %p84 = scmp.ne.s32.totalorder %s72, %s73
      %p85 = scmp.eq.s32.totalorder %s21, 1
      %p86 = por %p84, %p85
      %p88 = scmp.ne.s32.totalorder %s73, %s87
      %p89 = scmp.eq.s32.totalorder %s21, 0
      %p90 = por %p88, %p89
      %s91 = ssub.s32 %s15, %s22
      %p92 = scmp.eq.s32.totalorder %s91, 0
      %s94 = sadd.s32 %s93, 1
      %s95 = scalar_select %p92, %s93, %s94
      %p98 = pneg %p92
      %p99 = scmp.eq.s32.totalorder %s15, 1
      %p100 = por %p98, %p99
      %p101 = scmp.ne.s32.totalorder %s93, %s96
      %p102 = scmp.eq.s32.totalorder %s15, 0
      %p103 = por %p101, %p102
      %p104 = scmp.ne.s32.totalorder %s93, %s96
      %p105 = scmp.eq.s32.totalorder %s20, 1
      %p106 = por %p104, %p105
      %p107 = scmp.ne.s32.totalorder %s96, %s97
      %p108 = scmp.eq.s32.totalorder %s20, 0
      %p109 = por %p107, %p108
      %p110 = scmp.ne.s32.totalorder %s96, %s97
      %p111 = scmp.eq.s32.totalorder %s21, 1
      %p112 = por %p110, %p111
      %p114 = scmp.ne.s32.totalorder %s97, %s113
      %p115 = scmp.eq.s32.totalorder %s21, 0
      %p116 = por %p114, %p115
      %p117 = scmp.le.s32.totalorder 1, %s15
      %p118 = scmp.lt.s32.totalorder %s15, 3
      %p119 = pnand %p117, %p118
      %p120 = pneg %p119
      // Predicated region
      $region9: #{tpu_custom_call.1} parent=5 // pred_check
        _
      $region10: #{tpu_custom_call.1} parent=5 // pred_check_branch
        %122 = sbr.rel (%p119) target = $region12
      $region11: #{tpu_custom_call.1} parent=5 // pred_region
        %s123 = ssub.s32 %s15, 1
        // Predicated region
        $region13: #{tpu_custom_call.1} parent=11 // pred_check
          %p124 = pneg %p62
        $region14: #{tpu_custom_call.1} parent=11 // pred_check_branch
          %126 = sbr.rel (%p124) target = $region16
        $region15: #{tpu_custom_call.1} parent=11 // pred_region
          _
        $region16: #{tpu_custom_call.1} parent=11 // pred_fallthru
          _
        // Predicated region
        $region17: #{tpu_custom_call.1} parent=11 // pred_check
          %p127 = pneg %p83
        $region18: #{tpu_custom_call.1} parent=11 // pred_check_branch
          %129 = sbr.rel (%p127) target = $region20
        $region19: #{tpu_custom_call.1} parent=11 // pred_region
          _
        $region20: #{tpu_custom_call.1} parent=11 // pred_fallthru
          _
      $region12: #{tpu_custom_call.1} parent=5 // pred_fallthru
        _
      %p130 = scmp.lt.s32.totalorder %s15, 2
      // Predicated region
      $region21: #{tpu_custom_call.1} parent=5 // pred_check
        %p131 = pneg %p130
      $region22: #{tpu_custom_call.1} parent=5 // pred_check_branch
        %133 = sbr.rel (%p131) target = $region24
      $region23: #{tpu_custom_call.1} parent=5 // pred_region
        // Predicated region
        $region25: #{tpu_custom_call.1} parent=23 // pred_check
          %p134 = pneg %p35
        $region26: #{tpu_custom_call.1} parent=23 // pred_check_branch
          %136 = sbr.rel (%p134) target = $region28
        $region27: #{tpu_custom_call.1} parent=23 // pred_region
          %s137 = sand.u32 %s25, 1
          %s138 = scalar_lea.sflag [#allocation3], %s137
          %s139 = sand.u32 %s25, 1
          %s140 = smul.addr %s139, 8
          %s141 = scalar_lea.vmem [#allocation2], %s140
          %s143 = ssub.s32 128, 128
          %144 = vsyncadd %s138, %s143
          %s145 = smul.addr %s15, 2
          %s146 = smul.addr %s145, 64
          %s147 = scalar_lea.hbm %s0, %s146
          %s149 = sshll.u32 %s141, 4
          %s150 = int_to_ptr.vmem [resolvable:$true] %s149
          %152 = dma.hbm_to_vmem [thread:$0]  %s147, 128, %s150, %s138
        $region28: #{tpu_custom_call.1} parent=23 // pred_fallthru
          _
      $region24: #{tpu_custom_call.1} parent=5 // pred_fallthru
        _
      %p153 = scmp.le.s32.totalorder 1, %s15
      %p154 = scmp.lt.s32.totalorder %s15, 3
      %p155 = pnand %p153, %p154
      %p156 = pneg %p155
      // Predicated region
      $region29: #{tpu_custom_call.1} parent=5 // pred_check
        _
      $region30: #{tpu_custom_call.1} parent=5 // pred_check_branch
        %158 = sbr.rel (%p155) target = $region32
      $region31: #{tpu_custom_call.1} parent=5 // pred_region
        %s159 = ssub.s32 %s15, 1
        %s160 = sand.u32 %s28, 1
        %s161 = scalar_lea.sflag [#allocation3], %s160
        %s162 = sand.u32 %s28, 1
        %s163 = smul.addr %s162, 8
        %s164 = scalar_lea.vmem [#allocation2], %s163
        // Predicated region
        $region33: #{tpu_custom_call.1} parent=31 // pred_check
          %p165 = pneg %p41
        $region34: #{tpu_custom_call.1} parent=31 // pred_check_branch
          %167 = sbr.rel (%p165) target = $region36
        $region35: #{tpu_custom_call.1} parent=31 // pred_region
          %168 = dma.done %s161, 128
        $region36: #{tpu_custom_call.1} parent=31 // pred_fallthru
          _
        %s169 = sand.u32 %s28, 1
        %s170 = scalar_lea.sflag [#allocation3], %s169
        %s171 = sand.u32 %s28, 1
        %s172 = smul.addr %s171, 8
        %s173 = scalar_lea.vmem [#allocation2], %s172
        %p174 = pneg %p41
        %p175 = pneg %p38
        %p176 = pneg %p62
        %p177 = pneg %p59
        %p178 = pneg %p83
        %p179 = pneg %p80
        %p180 = pneg %p109
        %p181 = pneg %p106
        %s182 = sand.u32 %s96, 1
        %s183 = scalar_lea.sflag [#allocation4], %s182
        %s184 = sand.u32 %s96, 1
        %s185 = smul.addr %s184, 16
        %s186 = scalar_lea.vmem [#allocation5], %s185
        %v187 = vld [vmem:[%s164] sm:$0xff]
        %189 = vrot.lane.b32.xlu0 %v187, 112
        %v190 = vpop.permute.xlu0 %189
        %v192 = vcombine.high %v187, %v187
        %193 = vrot.lane.b32.xlu0 %v187, 16
        %v194 = vpop.permute.xlu0 %193
        %195 = vrot.lane.b32.xlu0 %v192, 16
        %v196 = vpop.permute.xlu0 %195
        %vm197 = vcmask 130048
        %v198 = vsel %vm197, %v194, %v196
        %201 = vrot.lane.b32.xlu0 %v192, 48
        %v202 = vpop.permute.xlu0 %201
        %v204 = vsel %vm197, %v190, %v194
        %v205 = vsel %vm197, %v196, %v202
        %208 = vrot.lane.b32.xlu0 %v204, 1
        %v209 = vpop.permute.xlu0 %208
        %210 = vrot.lane.b32.xlu0 %v198, 1
        %v211 = vpop.permute.xlu0 %210
        %212 = vrot.lane.b32.xlu0 %v205, 1
        %v213 = vpop.permute.xlu0 %212
        %vm214 = vcmask 7168
        %v215 = vsel %vm214, %v209, %v211
        %v216 = vsel %vm214, %v211, %v213
        %220 = vrot.lane.b32.xlu0 %v205, 2
        %v221 = vpop.permute.xlu0 %220
        %v223 = vsel %vm214, %v204, %v209
        %vm224 = vcmask 269312
        %v225 = vsel %vm224, %v216, %v221
        %v226 = vlaneseq
        %v227 = vand.u32 %v226, 127
        %228 = vrot.lane.b32.xlu0 %v227, 16
        %v229 = vpop.permute.xlu0 %228
        %230 = vrot.lane.b32.xlu0 %v227, 32
        %v231 = vpop.permute.xlu0 %230
        %232 = vrot.lane.b32.xlu0 %v227, 48
        %v233 = vpop.permute.xlu0 %232
        %234 = vrot.lane.b32.xlu0 %v227, 64
        %v235 = vpop.permute.xlu0 %234
        %236 = vrot.lane.b32.xlu0 %v227, 80
        %v237 = vpop.permute.xlu0 %236
        %238 = vrot.lane.b32.xlu0 %v227, 96
        %v239 = vpop.permute.xlu0 %238
        %240 = vrot.lane.b32.xlu0 %v227, 112
        %v241 = vpop.permute.xlu0 %240
        %v242 = vsel %vm197, %v227, %v229
        %vm243 = vcmask 261120
        %v244 = vsel %vm243, %v242, %v231
        %vm245 = vcmask 392192
        %v246 = vsel %vm245, %v244, %v233
        %vm247 = vcmask 523264
        %v248 = vsel %vm247, %v246, %v235
        %vm249 = vcmask 654336
        %v250 = vsel %vm249, %v248, %v237
        %vm251 = vcmask 785408
        %v252 = vsel %vm251, %v250, %v239
        %vm253 = vcmask 916480
        %v254 = vsel %vm253, %v252, %v241
        %vm255 = vcmp.lt.s32.totalorder %v254, 1
        %v256 = vsel %vm255, 1, 0
        %v257 = vlaneseq
        %v258 = vshrl.u32 %v257, 7
        %v259 = vsub.s32 0, %v258
        %v260 = vrot.slane %v256, %v259
        %vm261 = vcmp.eq.s32.totalorder %v260, 1
        %264 = vrot.lane.b32.xlu0 %v223, 126
        %v265 = vpop.permute.xlu0 %264
        %266 = vrot.lane.b32.xlu0 %v215, 126
        %v267 = vpop.permute.xlu0 %266
        %268 = vrot.lane.b32.xlu0 %v225, 126
        %v269 = vpop.permute.xlu0 %268
        %vm270 = vcmask 1031168
        %v271 = vsel %vm270, %v265, %v267
        %v272 = vsel %vm270, %v267, %v269
        %v275 = vsel %vm261, %v271, %v223
        %v276 = vsel %vm261, %v272, %v215
        %vm277 = vcmp.ge.s32.totalorder %v254, 15
        %v278 = vsel %vm277, 1, 0
        %v279 = vlaneseq
        %v280 = vshrl.u32 %v279, 7
        %v281 = vsub.s32 0, %v280
        %v282 = vrot.slane %v278, %v281
        %vm283 = vcmp.eq.s32.totalorder %v282, 1
        %v284 = vsel %vm283, %v223, %v271
        %v285 = vsel %vm283, %v215, %v272
        %286 = vrot.lane.b32.xlu0 %v223, 110
        %v287 = vpop.permute.xlu0 %286
        %288 = vrot.lane.b32.xlu0 %v215, 110
        %v289 = vpop.permute.xlu0 %288
        %290 = vrot.lane.b32.xlu0 %v225, 110
        %v291 = vpop.permute.xlu0 %290
        %vm292 = vcmask 900096
        %v293 = vsel %vm292, %v287, %v289
        %v294 = vsel %vm292, %v289, %v291
        %297 = vrot.lane.b32.xlu0 %v223, 112
        %v298 = vpop.permute.xlu0 %297
        %299 = vrot.lane.b32.xlu0 %v215, 112
        %v300 = vpop.permute.xlu0 %299
        %301 = vrot.lane.b32.xlu0 %v225, 112
        %v302 = vpop.permute.xlu0 %301
        %v303 = vsel %vm253, %v298, %v300
        %v304 = vsel %vm253, %v300, %v302
        %v307 = vsel %vm261, %v293, %v303
        %v308 = vsel %vm261, %v294, %v304
        %v309 = vsel %vm283, %v303, %v293
        %v310 = vsel %vm283, %v304, %v294
        %311 = vrot.lane.b32.xlu0 %v223, 94
        %v312 = vpop.permute.xlu0 %311
        %313 = vrot.lane.b32.xlu0 %v215, 94
        %v314 = vpop.permute.xlu0 %313
        %315 = vrot.lane.b32.xlu0 %v225, 94
        %v316 = vpop.permute.xlu0 %315
        %vm317 = vcmask 769024
        %v318 = vsel %vm317, %v312, %v314
        %v319 = vsel %vm317, %v314, %v316
        %322 = vrot.lane.b32.xlu0 %v223, 96
        %v323 = vpop.permute.xlu0 %322
        %324 = vrot.lane.b32.xlu0 %v215, 96
        %v325 = vpop.permute.xlu0 %324
        %326 = vrot.lane.b32.xlu0 %v225, 96
        %v327 = vpop.permute.xlu0 %326
        %v328 = vsel %vm251, %v323, %v325
        %v329 = vsel %vm251, %v325, %v327
        %v332 = vsel %vm261, %v318, %v328
        %v333 = vsel %vm261, %v319, %v329
        %v334 = vsel %vm283, %v328, %v318
        %v335 = vsel %vm283, %v329, %v319
        %v336 = vrot.slane %v223, 4
        %v337 = vrot.slane %v215, 4
        %v338 = vrot.slane %v225, 4
        %339 = vrot.lane.b32.xlu0 %v336, 127
        %v340 = vpop.permute.xlu0 %339
        %341 = vrot.lane.b32.xlu0 %v337, 127
        %v342 = vpop.permute.xlu0 %341
        %343 = vrot.lane.b32.xlu0 %v338, 127
        %v344 = vpop.permute.xlu0 %343
        %vm345 = vcmask 1039360
        %v346 = vsel %vm345, %v340, %v342
        %v347 = vsel %vm345, %v342, %v344
        %v352 = vrot.slane %v307, 4
        %v353 = vrot.slane %v308, 4
        %356 = vrot.lane.b32.xlu0 %v223, 111
        %v357 = vpop.permute.xlu0 %356
        %358 = vrot.lane.b32.xlu0 %v215, 111
        %v359 = vpop.permute.xlu0 %358
        %360 = vrot.lane.b32.xlu0 %v225, 111
        %v361 = vpop.permute.xlu0 %360
        %vm362 = vcmask 908288
        %v363 = vsel %vm362, %v357, %v359
        %v364 = vsel %vm362, %v359, %v361
        %v369 = vrot.slane %v309, 4
        %v370 = vrot.slane %v310, 4
        %373 = vrot.lane.b32.xlu0 %v336, 95
        %v374 = vpop.permute.xlu0 %373
        %375 = vrot.lane.b32.xlu0 %v337, 95
        %v376 = vpop.permute.xlu0 %375
        %377 = vrot.lane.b32.xlu0 %v338, 95
        %v378 = vpop.permute.xlu0 %377
        %vm379 = vcmask 777216
        %v380 = vsel %vm379, %v374, %v376
        %v381 = vsel %vm379, %v376, %v378
        %vm384 = vcmask 1043456
        %v385 = vsel %vm384, %v275, %v346
        %v386 = vsel %vm384, %v276, %v347
        %v387 = vsel %vm384, %v284, %v352
        %v388 = vsel %vm384, %v285, %v353
        %v389 = vsel %vm384, %v363, %v369
        %v390 = vsel %vm384, %v364, %v370
        %v391 = vsel %vm384, %v332, %v380
        %v392 = vsel %vm384, %v333, %v381
        %v393 = vld [vmem:[%s1] sm:$0xff]
        %v394 = vld [vmem:[%s2] sm:$0xff]
        %396 = vset.pattern.permute.xlu0 0
        %397 = vperm.xlu0 %396, %v394
        %v398 = vpop.permute.xlu0 %397
        %vm400 = vcmask 293888
        %v402 = vsel %vm400, %v393, 0
        %v405 = vsel %vm384, %v334, 0
        %v408 = vsel %vm384, %v335, 0
        %v410 = vand.u32 %v386, 4294901760
        %411 = vmatprep.subr.mxu0 %v410
        %v412 = vand.u32 %v385, 4294901760
        %413 = vmatpush1.msra.mxu0 %v412
        %v414 = vand.u32 %v388, 4294901760
        %415 = vmatprep.subr.mxu0 %v414
        %v416 = vand.u32 %v387, 4294901760
        %417 = vmatpush1.msra.mxu0 %v416
        %v418 = vand.u32 %v390, 4294901760
        %419 = vmatprep.subr.mxu0 %v418
        %v420 = vand.u32 %v389, 4294901760
        %421 = vmatpush1.msra.mxu0 %v420
        %v422 = vand.u32 %v392, 4294901760
        %423 = vmatprep.subr.mxu0 %v422
        %v424 = vand.u32 %v391, 4294901760
        %425 = vmatpush1.msra.mxu0 %v424
        %v426 = vand.u32 %v408, 4294901760
        %427 = vmatprep.subr.mxu0 %v426
        %v428 = vand.u32 %v405, 4294901760
        %429 = vmatpush1.msra.mxu0 %v428
        %430 = vmatprep.subr.mxu0 0.0
        %431 = vmatpush1.msra.mxu0 0.0
        %432 = vmatprep.subr.mxu0 0.0
        %433 = vmatpush1.msra.mxu0 0.0
        %434 = vmatprep.subr.mxu0 0.0
        %435 = vmatpush1.msra.mxu0 0.0
        %436 = vmatprep.subr.mxu0 0.0
        %437 = vmatpush1.msra.mxu0 0.0
        %438 = vmatprep.subr.mxu0 0.0
        %439 = vmatpush1.msra.mxu0 0.0
        %440 = vmatprep.subr.mxu0 0.0
        %441 = vmatpush1.msra.mxu0 0.0
        %442 = vmatprep.subr.mxu0 0.0
        %443 = vmatpush1.msra.mxu0 0.0
        %444 = vmatprep.subr.mxu0 0.0
        %445 = vmatpush1.msra.mxu0 0.0
        %446 = vmatprep.subr.mxu0 0.0
        %447 = vmatpush1.msra.mxu0 0.0
        %448 = vmatprep.subr.mxu0 0.0
        %449 = vmatpush1.msra.mxu0 0.0
        %450 = vmatprep.subr.mxu0 0.0
        %451 = vmatpush1.msra.mxu0 0.0
        %452 = vmatprep.subr.mxu0 0.0
        %453 = vmatpush1.msra.mxu0 0.0
        %454 = vmatprep.subr.mxu0 0.0
        %455 = vmatpush1.msra.mxu0 0.0
        %456 = vmatprep.subr.mxu0 0.0
        %457 = vmatpush1.msra.mxu0 0.0
        %458 = vmatprep.subr.mxu0 0.0
        %459 = vmatpush1.msra.mxu0 0.0
        %460 = vmatprep.subr.mxu0 0.0
        %461 = vmatpush1.msra.mxu0 0.0
        %462 = vmatprep.subr.mxu0 0.0
        %463 = vmatpush1.msra.mxu0 0.0
        %464 = vmatprep.subr.mxu0 0.0
        %465 = vmatpush1.msra.mxu0 0.0
        %466 = vmatprep.subr.mxu0 0.0
        %467 = vmatpush1.msra.mxu0 0.0
        %468 = vmatprep.subr.mxu0 0.0
        %469 = vmatpush1.msra.mxu0 0.0
        %470 = vmatprep.subr.mxu0 0.0
        %471 = vmatpush1.msra.mxu0 0.0
        %472 = vmatprep.subr.mxu0 0.0
        %473 = vmatpush1.msra.mxu0 0.0
        %474 = vmatprep.subr.mxu0 0.0
        %475 = vmatpush1.msra.mxu0 0.0
        %476 = vmatprep.subr.mxu0 0.0
        %477 = vmatpush1.msra.mxu0 0.0
        %478 = vmatprep.subr.mxu0 0.0
        %479 = vmatpush1.msra.mxu0 0.0
        %480 = vmatprep.subr.mxu0 0.0
        %481 = vmatpush1.msra.mxu0 0.0
        %482 = vmatprep.subr.mxu0 0.0
        %483 = vmatpush1.msra.mxu0 0.0
        %484 = vmatprep.mubr.f32.mxu0 0.0
        %v485 = vand.u32 %v402, 4294901760
        %v486 = vsub.f32 %v402, %v485
        %v487 = vand.u32 %v486, 4294901760
        %v488 = vsub.f32 %v486, %v487
        %v489 = vand.u32 %v488, 4294901760
        %490 = vmatmul.mubr.f32.gmra.mrb[0].mxu0 %v489
        %v491 = vpop.f32.mrb[0].mxu0
        %v492 = vadd.f32 %v398, %v491
        %v493 = vpop.f32.mrb[0].mxu0
        %v494 = vadd.f32 %v398, %v493
        %495 = vdwg.mxu0
        %v496 = vand.u32 %v386, 4294901760
        %v497 = vsub.f32 %v386, %v496
        %v498 = vand.u32 %v497, 4294901760
        %v499 = vsub.f32 %v497, %v498
        %v500 = vand.u32 %v499, 4294901760
        %501 = vmatprep.subr.mxu0 %v500
        %v502 = vand.u32 %v385, 4294901760
        %v503 = vsub.f32 %v385, %v502
        %v504 = vand.u32 %v503, 4294901760
        %v505 = vsub.f32 %v503, %v504
        %v506 = vand.u32 %v505, 4294901760
        %507 = vmatpush1.msra.mxu0 %v506
        %v508 = vand.u32 %v388, 4294901760
        %v509 = vsub.f32 %v388, %v508
        %v510 = vand.u32 %v509, 4294901760
        %v511 = vsub.f32 %v509, %v510
        %v512 = vand.u32 %v511, 4294901760
        %513 = vmatprep.subr.mxu0 %v512
        %v514 = vand.u32 %v387, 4294901760
        %v515 = vsub.f32 %v387, %v514
        %v516 = vand.u32 %v515, 4294901760
        %v517 = vsub.f32 %v515, %v516
        %v518 = vand.u32 %v517, 4294901760
        %519 = vmatpush1.msra.mxu0 %v518
        %v520 = vand.u32 %v390, 4294901760
        %v521 = vsub.f32 %v390, %v520
        %v522 = vand.u32 %v521, 4294901760
        %v523 = vsub.f32 %v521, %v522
        %v524 = vand.u32 %v523, 4294901760
        %525 = vmatprep.subr.mxu0 %v524
        %v526 = vand.u32 %v389, 4294901760
        %v527 = vsub.f32 %v389, %v526
        %v528 = vand.u32 %v527, 4294901760
        %v529 = vsub.f32 %v527, %v528
        %v530 = vand.u32 %v529, 4294901760
        %531 = vmatpush1.msra.mxu0 %v530
        %v532 = vand.u32 %v392, 4294901760
        %v533 = vsub.f32 %v392, %v532
        %v534 = vand.u32 %v533, 4294901760
        %v535 = vsub.f32 %v533, %v534
        %v536 = vand.u32 %v535, 4294901760
        %537 = vmatprep.subr.mxu0 %v536
        %v538 = vand.u32 %v391, 4294901760
        %v539 = vsub.f32 %v391, %v538
        %v540 = vand.u32 %v539, 4294901760
        %v541 = vsub.f32 %v539, %v540
        %v542 = vand.u32 %v541, 4294901760
        %543 = vmatpush1.msra.mxu0 %v542
        %v544 = vand.u32 %v408, 4294901760
        %v545 = vsub.f32 %v408, %v544
        %v546 = vand.u32 %v545, 4294901760
        %v547 = vsub.f32 %v545, %v546
        %v548 = vand.u32 %v547, 4294901760
        %549 = vmatprep.subr.mxu0 %v548
        %v550 = vand.u32 %v405, 4294901760
        %v551 = vsub.f32 %v405, %v550
        %v552 = vand.u32 %v551, 4294901760
        %v553 = vsub.f32 %v551, %v552
        %v554 = vand.u32 %v553, 4294901760
        %555 = vmatpush1.msra.mxu0 %v554
        %556 = vmatprep.subr.mxu0 0.0
        %557 = vmatpush1.msra.mxu0 0.0
        %558 = vmatprep.subr.mxu0 0.0
        %559 = vmatpush1.msra.mxu0 0.0
        %560 = vmatprep.subr.mxu0 0.0
        %561 = vmatpush1.msra.mxu0 0.0
        %562 = vmatprep.subr.mxu0 0.0
        %563 = vmatpush1.msra.mxu0 0.0
        %564 = vmatprep.subr.mxu0 0.0
        %565 = vmatpush1.msra.mxu0 0.0
        %566 = vmatprep.subr.mxu0 0.0
        %567 = vmatpush1.msra.mxu0 0.0
        %568 = vmatprep.subr.mxu0 0.0
        %569 = vmatpush1.msra.mxu0 0.0
        %570 = vmatprep.subr.mxu0 0.0
        %571 = vmatpush1.msra.mxu0 0.0
        %572 = vmatprep.subr.mxu0 0.0
        %573 = vmatpush1.msra.mxu0 0.0
        %574 = vmatprep.subr.mxu0 0.0
        %575 = vmatpush1.msra.mxu0 0.0
        %576 = vmatprep.subr.mxu0 0.0
        %577 = vmatpush1.msra.mxu0 0.0
        %578 = vmatprep.subr.mxu0 0.0
        %579 = vmatpush1.msra.mxu0 0.0
        %580 = vmatprep.subr.mxu0 0.0
        %581 = vmatpush1.msra.mxu0 0.0
        %582 = vmatprep.subr.mxu0 0.0
        %583 = vmatpush1.msra.mxu0 0.0
        %584 = vmatprep.subr.mxu0 0.0
        %585 = vmatpush1.msra.mxu0 0.0
        %586 = vmatprep.subr.mxu0 0.0
        %587 = vmatpush1.msra.mxu0 0.0
        %588 = vmatprep.subr.mxu0 0.0
        %589 = vmatpush1.msra.mxu0 0.0
        %590 = vmatprep.subr.mxu0 0.0
        %591 = vmatpush1.msra.mxu0 0.0
        %592 = vmatprep.subr.mxu0 0.0
        %593 = vmatpush1.msra.mxu0 0.0
        %594 = vmatprep.subr.mxu0 0.0
        %595 = vmatpush1.msra.mxu0 0.0
        %596 = vmatprep.subr.mxu0 0.0
        %597 = vmatpush1.msra.mxu0 0.0
        %598 = vmatprep.subr.mxu0 0.0
        %599 = vmatpush1.msra.mxu0 0.0
        %600 = vmatprep.subr.mxu0 0.0
        %601 = vmatpush1.msra.mxu0 0.0
        %602 = vmatprep.subr.mxu0 0.0
        %603 = vmatpush1.msra.mxu0 0.0
        %604 = vmatprep.subr.mxu0 0.0
        %605 = vmatpush1.msra.mxu0 0.0
        %606 = vmatprep.subr.mxu0 0.0
        %607 = vmatpush1.msra.mxu0 0.0
        %608 = vmatprep.subr.mxu0 0.0
        %609 = vmatpush1.msra.mxu0 0.0
        %610 = vmatprep.mubr.f32.mxu0 0.0
        %v611 = vand.u32 %v402, 4294901760
        %612 = vmatmul.mubr.f32.gmra.mrb[0].mxu0 %v611
        %v613 = vpop.f32.mrb[0].mxu0
        %v614 = vadd.f32 %v492, %v613
        %v615 = vpop.f32.mrb[0].mxu0
        %v616 = vadd.f32 %v494, %v615
        %617 = vdwg.mxu0
        %v618 = vand.u32 %v386, 4294901760
        %v619 = vsub.f32 %v386, %v618
        %620 = vmatprep.subr.mxu0 %v619
        %v621 = vand.u32 %v385, 4294901760
        %v622 = vsub.f32 %v385, %v621
        %623 = vmatpush1.msra.mxu0 %v622
        %v624 = vand.u32 %v388, 4294901760
        %v625 = vsub.f32 %v388, %v624
        %626 = vmatprep.subr.mxu0 %v625
        %v627 = vand.u32 %v387, 4294901760
        %v628 = vsub.f32 %v387, %v627
        %629 = vmatpush1.msra.mxu0 %v628
        %v630 = vand.u32 %v390, 4294901760
        %v631 = vsub.f32 %v390, %v630
        %632 = vmatprep.subr.mxu0 %v631
        %v633 = vand.u32 %v389, 4294901760
        %v634 = vsub.f32 %v389, %v633
        %635 = vmatpush1.msra.mxu0 %v634
        %v636 = vand.u32 %v392, 4294901760
        %v637 = vsub.f32 %v392, %v636
        %638 = vmatprep.subr.mxu0 %v637
        %v639 = vand.u32 %v391, 4294901760
        %v640 = vsub.f32 %v391, %v639
        %641 = vmatpush1.msra.mxu0 %v640
        %v642 = vand.u32 %v408, 4294901760
        %v643 = vsub.f32 %v408, %v642
        %644 = vmatprep.subr.mxu0 %v643
        %v645 = vand.u32 %v405, 4294901760
        %v646 = vsub.f32 %v405, %v645
        %647 = vmatpush1.msra.mxu0 %v646
        %648 = vmatprep.subr.mxu0 0.0
        %649 = vmatpush1.msra.mxu0 0.0
        %650 = vmatprep.subr.mxu0 0.0
        %651 = vmatpush1.msra.mxu0 0.0
        %652 = vmatprep.subr.mxu0 0.0
        %653 = vmatpush1.msra.mxu0 0.0
        %654 = vmatprep.subr.mxu0 0.0
        %655 = vmatpush1.msra.mxu0 0.0
        %656 = vmatprep.subr.mxu0 0.0
        %657 = vmatpush1.msra.mxu0 0.0
        %658 = vmatprep.subr.mxu0 0.0
        %659 = vmatpush1.msra.mxu0 0.0
        %660 = vmatprep.subr.mxu0 0.0
        %661 = vmatpush1.msra.mxu0 0.0
        %662 = vmatprep.subr.mxu0 0.0
        %663 = vmatpush1.msra.mxu0 0.0
        %664 = vmatprep.subr.mxu0 0.0
        %665 = vmatpush1.msra.mxu0 0.0
        %666 = vmatprep.subr.mxu0 0.0
        %667 = vmatpush1.msra.mxu0 0.0
        %668 = vmatprep.subr.mxu0 0.0
        %669 = vmatpush1.msra.mxu0 0.0
        %670 = vmatprep.subr.mxu0 0.0
        %671 = vmatpush1.msra.mxu0 0.0
        %672 = vmatprep.subr.mxu0 0.0
        %673 = vmatpush1.msra.mxu0 0.0
        %674 = vmatprep.subr.mxu0 0.0
        %675 = vmatpush1.msra.mxu0 0.0
        %676 = vmatprep.subr.mxu0 0.0
        %677 = vmatpush1.msra.mxu0 0.0
        %678 = vmatprep.subr.mxu0 0.0
        %679 = vmatpush1.msra.mxu0 0.0
        %680 = vmatprep.subr.mxu0 0.0
        %681 = vmatpush1.msra.mxu0 0.0
        %682 = vmatprep.subr.mxu0 0.0
        %683 = vmatpush1.msra.mxu0 0.0
        %684 = vmatprep.subr.mxu0 0.0
        %685 = vmatpush1.msra.mxu0 0.0
        %686 = vmatprep.subr.mxu0 0.0
        %687 = vmatpush1.msra.mxu0 0.0
        %688 = vmatprep.subr.mxu0 0.0
        %689 = vmatpush1.msra.mxu0 0.0
        %690 = vmatprep.subr.mxu0 0.0
        %691 = vmatpush1.msra.mxu0 0.0
        %692 = vmatprep.subr.mxu0 0.0
        %693 = vmatpush1.msra.mxu0 0.0
        %694 = vmatprep.subr.mxu0 0.0
        %695 = vmatpush1.msra.mxu0 0.0
        %696 = vmatprep.subr.mxu0 0.0
        %697 = vmatpush1.msra.mxu0 0.0
        %698 = vmatprep.subr.mxu0 0.0
        %699 = vmatpush1.msra.mxu0 0.0
        %700 = vmatprep.subr.mxu0 0.0
        %701 = vmatpush1.msra.mxu0 0.0
        %702 = vmatprep.mubr.f32.mxu0 0.0
        %v703 = vand.u32 %v402, 4294901760
        %v704 = vsub.f32 %v402, %v703
        %705 = vmatmul.mubr.f32.gmra.mrb[0].mxu0 %v704
        %v706 = vpop.f32.mrb[0].mxu0
        %v707 = vadd.f32 %v614, %v706
        %v708 = vpop.f32.mrb[0].mxu0
        %v709 = vadd.f32 %v616, %v708
        %710 = vdwg.mxu0
        %v711 = vand.u32 %v386, 4294901760
        %712 = vmatprep.subr.mxu0 %v711
        %v713 = vand.u32 %v385, 4294901760
        %714 = vmatpush1.msra.mxu0 %v713
        %v715 = vand.u32 %v388, 4294901760
        %716 = vmatprep.subr.mxu0 %v715
        %v717 = vand.u32 %v387, 4294901760
        %718 = vmatpush1.msra.mxu0 %v717
        %v719 = vand.u32 %v390, 4294901760
        %720 = vmatprep.subr.mxu0 %v719
        %v721 = vand.u32 %v389, 4294901760
        %722 = vmatpush1.msra.mxu0 %v721
        %v723 = vand.u32 %v392, 4294901760
        %724 = vmatprep.subr.mxu0 %v723
        %v725 = vand.u32 %v391, 4294901760
        %726 = vmatpush1.msra.mxu0 %v725
        %v727 = vand.u32 %v408, 4294901760
        %728 = vmatprep.subr.mxu0 %v727
        %v729 = vand.u32 %v405, 4294901760
        %730 = vmatpush1.msra.mxu0 %v729
        %731 = vmatprep.subr.mxu0 0.0
        %732 = vmatpush1.msra.mxu0 0.0
        %733 = vmatprep.subr.mxu0 0.0
        %734 = vmatpush1.msra.mxu0 0.0
        %735 = vmatprep.subr.mxu0 0.0
        %736 = vmatpush1.msra.mxu0 0.0
        %737 = vmatprep.subr.mxu0 0.0
        %738 = vmatpush1.msra.mxu0 0.0
        %739 = vmatprep.subr.mxu0 0.0
        %740 = vmatpush1.msra.mxu0 0.0
        %741 = vmatprep.subr.mxu0 0.0
        %742 = vmatpush1.msra.mxu0 0.0
        %743 = vmatprep.subr.mxu0 0.0
        %744 = vmatpush1.msra.mxu0 0.0
        %745 = vmatprep.subr.mxu0 0.0
        %746 = vmatpush1.msra.mxu0 0.0
        %747 = vmatprep.subr.mxu0 0.0
        %748 = vmatpush1.msra.mxu0 0.0
        %749 = vmatprep.subr.mxu0 0.0
        %750 = vmatpush1.msra.mxu0 0.0
        %751 = vmatprep.subr.mxu0 0.0
        %752 = vmatpush1.msra.mxu0 0.0
        %753 = vmatprep.subr.mxu0 0.0
        %754 = vmatpush1.msra.mxu0 0.0
        %755 = vmatprep.subr.mxu0 0.0
        %756 = vmatpush1.msra.mxu0 0.0
        %757 = vmatprep.subr.mxu0 0.0
        %758 = vmatpush1.msra.mxu0 0.0
        %759 = vmatprep.subr.mxu0 0.0
        %760 = vmatpush1.msra.mxu0 0.0
        %761 = vmatprep.subr.mxu0 0.0
        %762 = vmatpush1.msra.mxu0 0.0
        %763 = vmatprep.subr.mxu0 0.0
        %764 = vmatpush1.msra.mxu0 0.0
        %765 = vmatprep.subr.mxu0 0.0
        %766 = vmatpush1.msra.mxu0 0.0
        %767 = vmatprep.subr.mxu0 0.0
        %768 = vmatpush1.msra.mxu0 0.0
        %769 = vmatprep.subr.mxu0 0.0
        %770 = vmatpush1.msra.mxu0 0.0
        %771 = vmatprep.subr.mxu0 0.0
        %772 = vmatpush1.msra.mxu0 0.0
        %773 = vmatprep.subr.mxu0 0.0
        %774 = vmatpush1.msra.mxu0 0.0
        %775 = vmatprep.subr.mxu0 0.0
        %776 = vmatpush1.msra.mxu0 0.0
        %777 = vmatprep.subr.mxu0 0.0
        %778 = vmatpush1.msra.mxu0 0.0
        %779 = vmatprep.subr.mxu0 0.0
        %780 = vmatpush1.msra.mxu0 0.0
        %781 = vmatprep.subr.mxu0 0.0
        %782 = vmatpush1.msra.mxu0 0.0
        %783 = vmatprep.subr.mxu0 0.0
        %784 = vmatpush1.msra.mxu0 0.0
        %785 = vmatprep.mubr.f32.mxu0 0.0
        %v786 = vand.u32 %v402, 4294901760
        %v787 = vsub.f32 %v402, %v786
        %v788 = vand.u32 %v787, 4294901760
        %789 = vmatmul.mubr.f32.gmra.mrb[0].mxu0 %v788
        %v790 = vpop.f32.mrb[0].mxu0
        %v791 = vadd.f32 %v707, %v790
        %v792 = vpop.f32.mrb[0].mxu0
        %v793 = vadd.f32 %v709, %v792
        %794 = vdwg.mxu0
        %v795 = vand.u32 %v386, 4294901760
        %v796 = vsub.f32 %v386, %v795
        %v797 = vand.u32 %v796, 4294901760
        %798 = vmatprep.subr.mxu0 %v797
        %v799 = vand.u32 %v385, 4294901760
        %v800 = vsub.f32 %v385, %v799
        %v801 = vand.u32 %v800, 4294901760
        %802 = vmatpush1.msra.mxu0 %v801
        %v803 = vand.u32 %v388, 4294901760
        %v804 = vsub.f32 %v388, %v803
        %v805 = vand.u32 %v804, 4294901760
        %806 = vmatprep.subr.mxu0 %v805
        %v807 = vand.u32 %v387, 4294901760
        %v808 = vsub.f32 %v387, %v807
        %v809 = vand.u32 %v808, 4294901760
        %810 = vmatpush1.msra.mxu0 %v809
        %v811 = vand.u32 %v390, 4294901760
        %v812 = vsub.f32 %v390, %v811
        %v813 = vand.u32 %v812, 4294901760
        %814 = vmatprep.subr.mxu0 %v813
        %v815 = vand.u32 %v389, 4294901760
        %v816 = vsub.f32 %v389, %v815
        %v817 = vand.u32 %v816, 4294901760
        %818 = vmatpush1.msra.mxu0 %v817
        %v819 = vand.u32 %v392, 4294901760
        %v820 = vsub.f32 %v392, %v819
        %v821 = vand.u32 %v820, 4294901760
        %822 = vmatprep.subr.mxu0 %v821
        %v823 = vand.u32 %v391, 4294901760
        %v824 = vsub.f32 %v391, %v823
        %v825 = vand.u32 %v824, 4294901760
        %826 = vmatpush1.msra.mxu0 %v825
        %v827 = vand.u32 %v408, 4294901760
        %v828 = vsub.f32 %v408, %v827
        %v829 = vand.u32 %v828, 4294901760
        %830 = vmatprep.subr.mxu0 %v829
        %v831 = vand.u32 %v405, 4294901760
        %v832 = vsub.f32 %v405, %v831
        %v833 = vand.u32 %v832, 4294901760
        %834 = vmatpush1.msra.mxu0 %v833
        %835 = vmatprep.subr.mxu0 0.0
        %836 = vmatpush1.msra.mxu0 0.0
        %837 = vmatprep.subr.mxu0 0.0
        %838 = vmatpush1.msra.mxu0 0.0
        %839 = vmatprep.subr.mxu0 0.0
        %840 = vmatpush1.msra.mxu0 0.0
        %841 = vmatprep.subr.mxu0 0.0
        %842 = vmatpush1.msra.mxu0 0.0
        %843 = vmatprep.subr.mxu0 0.0
        %844 = vmatpush1.msra.mxu0 0.0
        %845 = vmatprep.subr.mxu0 0.0
        %846 = vmatpush1.msra.mxu0 0.0
        %847 = vmatprep.subr.mxu0 0.0
        %848 = vmatpush1.msra.mxu0 0.0
        %849 = vmatprep.subr.mxu0 0.0
        %850 = vmatpush1.msra.mxu0 0.0
        %851 = vmatprep.subr.mxu0 0.0
        %852 = vmatpush1.msra.mxu0 0.0
        %853 = vmatprep.subr.mxu0 0.0
        %854 = vmatpush1.msra.mxu0 0.0
        %855 = vmatprep.subr.mxu0 0.0
        %856 = vmatpush1.msra.mxu0 0.0
        %857 = vmatprep.subr.mxu0 0.0
        %858 = vmatpush1.msra.mxu0 0.0
        %859 = vmatprep.subr.mxu0 0.0
        %860 = vmatpush1.msra.mxu0 0.0
        %861 = vmatprep.subr.mxu0 0.0
        %862 = vmatpush1.msra.mxu0 0.0
        %863 = vmatprep.subr.mxu0 0.0
        %864 = vmatpush1.msra.mxu0 0.0
        %865 = vmatprep.subr.mxu0 0.0
        %866 = vmatpush1.msra.mxu0 0.0
        %867 = vmatprep.subr.mxu0 0.0
        %868 = vmatpush1.msra.mxu0 0.0
        %869 = vmatprep.subr.mxu0 0.0
        %870 = vmatpush1.msra.mxu0 0.0
        %871 = vmatprep.subr.mxu0 0.0
        %872 = vmatpush1.msra.mxu0 0.0
        %873 = vmatprep.subr.mxu0 0.0
        %874 = vmatpush1.msra.mxu0 0.0
        %875 = vmatprep.subr.mxu0 0.0
        %876 = vmatpush1.msra.mxu0 0.0
        %877 = vmatprep.subr.mxu0 0.0
        %878 = vmatpush1.msra.mxu0 0.0
        %879 = vmatprep.subr.mxu0 0.0
        %880 = vmatpush1.msra.mxu0 0.0
        %881 = vmatprep.subr.mxu0 0.0
        %882 = vmatpush1.msra.mxu0 0.0
        %883 = vmatprep.subr.mxu0 0.0
        %884 = vmatpush1.msra.mxu0 0.0
        %885 = vmatprep.subr.mxu0 0.0
        %886 = vmatpush1.msra.mxu0 0.0
        %887 = vmatprep.subr.mxu0 0.0
        %888 = vmatpush1.msra.mxu0 0.0
        %889 = vmatprep.mubr.f32.mxu0 0.0
        %v890 = vand.u32 %v402, 4294901760
        %891 = vmatmul.mubr.f32.gmra.mrb[0].mxu0 %v890
        %v892 = vpop.f32.mrb[0].mxu0
        %v893 = vadd.f32 %v791, %v892
        %v894 = vpop.f32.mrb[0].mxu0
        %v895 = vadd.f32 %v793, %v894
        %896 = vdwg.mxu0
        %v897 = vand.u32 %v386, 4294901760
        %898 = vmatprep.subr.mxu0 %v897
        %v899 = vand.u32 %v385, 4294901760
        %900 = vmatpush1.msra.mxu0 %v899
        %v901 = vand.u32 %v388, 4294901760
        %902 = vmatprep.subr.mxu0 %v901
        %v903 = vand.u32 %v387, 4294901760
        %904 = vmatpush1.msra.mxu0 %v903
        %v905 = vand.u32 %v390, 4294901760
        %906 = vmatprep.subr.mxu0 %v905
        %v907 = vand.u32 %v389, 4294901760
        %908 = vmatpush1.msra.mxu0 %v907
        %v909 = vand.u32 %v392, 4294901760
        %910 = vmatprep.subr.mxu0 %v909
        %v911 = vand.u32 %v391, 4294901760
        %912 = vmatpush1.msra.mxu0 %v911
        %v913 = vand.u32 %v408, 4294901760
        %914 = vmatprep.subr.mxu0 %v913
        %v915 = vand.u32 %v405, 4294901760
        %916 = vmatpush1.msra.mxu0 %v915
        %917 = vmatprep.subr.mxu0 0.0
        %918 = vmatpush1.msra.mxu0 0.0
        %919 = vmatprep.subr.mxu0 0.0
        %920 = vmatpush1.msra.mxu0 0.0
        %921 = vmatprep.subr.mxu0 0.0
        %922 = vmatpush1.msra.mxu0 0.0
        %923 = vmatprep.subr.mxu0 0.0
        %924 = vmatpush1.msra.mxu0 0.0
        %925 = vmatprep.subr.mxu0 0.0
        %926 = vmatpush1.msra.mxu0 0.0
        %927 = vmatprep.subr.mxu0 0.0
        %928 = vmatpush1.msra.mxu0 0.0
        %929 = vmatprep.subr.mxu0 0.0
        %930 = vmatpush1.msra.mxu0 0.0
        %931 = vmatprep.subr.mxu0 0.0
        %932 = vmatpush1.msra.mxu0 0.0
        %933 = vmatprep.subr.mxu0 0.0
        %934 = vmatpush1.msra.mxu0 0.0
        %935 = vmatprep.subr.mxu0 0.0
        %936 = vmatpush1.msra.mxu0 0.0
        %937 = vmatprep.subr.mxu0 0.0
        %938 = vmatpush1.msra.mxu0 0.0
        %939 = vmatprep.subr.mxu0 0.0
        %940 = vmatpush1.msra.mxu0 0.0
        %941 = vmatprep.subr.mxu0 0.0
        %942 = vmatpush1.msra.mxu0 0.0
        %943 = vmatprep.subr.mxu0 0.0
        %944 = vmatpush1.msra.mxu0 0.0
        %945 = vmatprep.subr.mxu0 0.0
        %946 = vmatpush1.msra.mxu0 0.0
        %947 = vmatprep.subr.mxu0 0.0
        %948 = vmatpush1.msra.mxu0 0.0
        %949 = vmatprep.subr.mxu0 0.0
        %950 = vmatpush1.msra.mxu0 0.0
        %951 = vmatprep.subr.mxu0 0.0
        %952 = vmatpush1.msra.mxu0 0.0
        %953 = vmatprep.subr.mxu0 0.0
        %954 = vmatpush1.msra.mxu0 0.0
        %955 = vmatprep.subr.mxu0 0.0
        %956 = vmatpush1.msra.mxu0 0.0
        %957 = vmatprep.subr.mxu0 0.0
        %958 = vmatpush1.msra.mxu0 0.0
        %959 = vmatprep.subr.mxu0 0.0
        %960 = vmatpush1.msra.mxu0 0.0
        %961 = vmatprep.subr.mxu0 0.0
        %962 = vmatpush1.msra.mxu0 0.0
        %963 = vmatprep.subr.mxu0 0.0
        %964 = vmatpush1.msra.mxu0 0.0
        %965 = vmatprep.subr.mxu0 0.0
        %966 = vmatpush1.msra.mxu0 0.0
        %967 = vmatprep.subr.mxu0 0.0
        %968 = vmatpush1.msra.mxu0 0.0
        %969 = vmatprep.subr.mxu0 0.0
        %970 = vmatpush1.msra.mxu0 0.0
        %971 = vmatprep.mubr.f32.mxu0 0.0
        %v972 = vand.u32 %v402, 4294901760
        %973 = vmatmul.mubr.f32.gmra.mrb[0].mxu0 %v972
        %v974 = vpop.f32.mrb[0].mxu0
        %v975 = vadd.f32 %v893, %v974
        %v976 = vpop.f32.mrb[0].mxu0
        %v977 = vadd.f32 %v895, %v976
        %978 = vdwg.mxu0
        %v979 = vmax.f32 %v975, 0.0
        %v980 = vmax.f32 %v977, 0.0
        %981 = vst [vmem:[%s186] sm:$0xff] %v979
        %982 = vst [vmem:[%s186 + $0x8] sm:$0xff] %v980
        %s983 = sand.u32 %s96, 1
        %s984 = scalar_lea.sflag [#allocation4], %s983
        %s985 = sand.u32 %s96, 1
        %s986 = smul.addr %s985, 16
        %s987 = scalar_lea.vmem [#allocation5], %s986
        // Predicated region
        $region37: #{tpu_custom_call.1} parent=31 // pred_check
          %p988 = pneg %p106
        $region38: #{tpu_custom_call.1} parent=31 // pred_check_branch
          %990 = sbr.rel (%p988) target = $region40
        $region39: #{tpu_custom_call.1} parent=31 // pred_region
          %s992 = ssub.s32 256, 256
          %993 = vsyncadd %s984, %s992
          %s994 = smul.addr %s20, 2
          %s995 = smul.addr %s994, 128
          %s996 = scalar_lea.hbm %s3, %s995
          %s998 = sshll.u32 %s987, 4
          %s999 = int_to_ptr.vmem [resolvable:$true] %s998
          %1001 = dma.vmem_to_hbm [thread:$0]  %s999, 256, %s996, %s984
        $region40: #{tpu_custom_call.1} parent=31 // pred_fallthru
          _
      $region32: #{tpu_custom_call.1} parent=5 // pred_fallthru
        _
      %p1002 = scmp.le.s32.totalorder 2, %s15
      // Predicated region
      $region41: #{tpu_custom_call.1} parent=5 // pred_check
        %p1003 = pneg %p1002
      $region42: #{tpu_custom_call.1} parent=5 // pred_check_branch
        %1005 = sbr.rel (%p1003) target = $region44
      $region43: #{tpu_custom_call.1} parent=5 // pred_region
        %s1006 = ssub.s32 %s15, 2
        // Predicated region
        $region45: #{tpu_custom_call.1} parent=43 // pred_check
          %p1007 = pneg %p112
        $region46: #{tpu_custom_call.1} parent=43 // pred_check_branch
          %1009 = sbr.rel (%p1007) target = $region48
        $region47: #{tpu_custom_call.1} parent=43 // pred_region
          %s1010 = sand.u32 %s97, 1
          %s1011 = scalar_lea.sflag [#allocation4], %s1010
          %s1012 = sand.u32 %s97, 1
          %s1013 = smul.addr %s1012, 16
          %s1014 = scalar_lea.vmem [#allocation5], %s1013
          %1015 = dma.done %s1011, 256
        $region48: #{tpu_custom_call.1} parent=43 // pred_fallthru
          _
      $region44: #{tpu_custom_call.1} parent=5 // pred_fallthru
        _
    $region6: #{tpu_custom_call.1} parent=1 // loop_footer
      %s19 = sadd.s32 1, %s15
    $region7: #{tpu_custom_call.1} parent=1 // loop_footer_branch
      %14 = sbr.rel target = $region3
    $region8: #{tpu_custom_call.1} parent=1 // loop_exit
      _
    %1016 = vsyncpa [#allocation3], 1
    %s1017 = scalar_lea.sflag [#allocation3], 1
    %1018 = vsyncpa %s1017, 1
    %1019 = vsyncpa [#allocation4], 1
    %s1020 = scalar_lea.sflag [#allocation4], 1
    %1021 = vsyncpa %s1020, 1

</llo_original>
